<compile_context>
chip_gen: v7x
topology: tpu7x:2x2x1
jax: 0.10.0
libtpu: 0.0.40
codegen_flags: <defaults>
</compile_context>

<pallas_src>
import functools

import jax
import jax.numpy as jnp
from jax.experimental import pallas as pl
from jax.experimental.pallas import tpu as pltpu


def _round_up(x, m):
    return (x + m - 1) // m * m


def _choose_row_tile(m):
    """Pick TM (multiple of 8): minimize row padding, keep >=2 grid steps
    on the parallel row axis when m allows (v7x megacore + pipelining)."""
    m8 = _round_up(max(m, 1), 8)
    if m8 <= 8:
        return m8
    if m8 < 1024:
        # Two row tiles: <8 rows of padding and two parallel grid steps.
        return _round_up((m8 + 1) // 2, 8)
    # Large M: tile in {512, 384, 256} that minimizes padding (prefer larger).
    return min(((_round_up(m8, c) - m8, -c), c) for c in (512, 384, 256))[1]


def _choose_col_tile(dim_pad, candidates=(512, 384, 256, 128)):
    """Largest candidate tile that evenly divides the padded dimension."""
    for c in candidates:
        if dim_pad % c == 0:
            return c
    return 128


def _mingru_kernel(x_ref, wh_ref, wz_ref, bh_ref, bz_ref, o_ref, acc_h, acc_z):
    """One (TM, TK) x tile against (TK, TN) tiles of W_h and W_z.

    f32 accumulation across the K grid axis; gated epilogue on the last step.
    """
    k_step = pl.program_id(2)

    @pl.when(k_step == 0)
    def _():
        acc_h[...] = jnp.zeros_like(acc_h)
        acc_z[...] = jnp.zeros_like(acc_z)

    x = x_ref[...]
    acc_h[...] += jnp.dot(x, wh_ref[...], preferred_element_type=jnp.float32)
    acc_z[...] += jnp.dot(x, wz_ref[...], preferred_element_type=jnp.float32)

    @pl.when(k_step == pl.num_programs(2) - 1)
    def _():
        htilde = acc_h[...] + bh_ref[...]
        z_lin = acc_z[...] + bz_ref[...]
        o_ref[...] = (jax.nn.sigmoid(z_lin) * htilde).astype(o_ref.dtype)


def prepare_params(wh_t, bh, wz_t, bz):
    """One-time parameter prep (NOT on the per-call path): pad weights to
    128-aligned (Kp, Hp) and biases to (1, Hp) f32."""
    k, h = wh_t.shape
    k_pad = _round_up(k, 128)
    h_pad = _round_up(h, 128)

    def pad_w(w):
        return jnp.pad(w, ((0, k_pad - k), (0, h_pad - h)))

    def pad_b(b):
        return jnp.pad(b.astype(jnp.float32), (0, h_pad - h)).reshape(1, h_pad)

    return pad_w(wh_t), pad_b(bh), pad_w(wz_t), pad_b(bz)


@functools.partial(jax.jit, static_argnames=("hidden_size",))
def mingru_forward(x, wh_p, bh_p, wz_p, bz_p, *, hidden_size):
    """x: (..., input_size) -> (..., hidden_size).

    wh_p/wz_p: padded (Kp, Hp) pre-transposed weights from prepare_params.
    bh_p/bz_p: padded (1, Hp) f32 biases from prepare_params.
    """
    orig_shape = x.shape
    k = orig_shape[-1]
    k_pad, h_pad = wh_p.shape
    h = hidden_size

    x2d = x.reshape(-1, k)
    m = x2d.shape[0]

    tm = _choose_row_tile(m)
    m_pad = _round_up(_round_up(m, 8), tm)
    tn = _choose_col_tile(h_pad)
    tk = _choose_col_tile(k_pad)

    x_p = jnp.pad(x2d, ((0, m_pad - m), (0, k_pad - k)))

    grid = (m_pad // tm, h_pad // tn, k_pad // tk)
    n_row_tiles, n_col_tiles, _ = grid
    itemsize = x_p.dtype.itemsize

    cost = pl.CostEstimate(
        flops=4 * m_pad * k_pad * h_pad + 4 * m_pad * h_pad,
        transcendentals=m_pad * h_pad,
        bytes_accessed=(
            n_col_tiles * x_p.size * itemsize                      # x re-reads per N tile
            + n_row_tiles * (wh_p.size + wz_p.size) * wh_p.dtype.itemsize
            + (bh_p.size + bz_p.size) * 4
            + m_pad * h_pad * itemsize
        ),
    )

    out = pl.pallas_call(
        _mingru_kernel,
        out_shape=jax.ShapeDtypeStruct((m_pad, h_pad), x.dtype),
        grid_spec=pltpu.PrefetchScalarGridSpec(
            num_scalar_prefetch=0,
            grid=grid,
            in_specs=[
                pl.BlockSpec((tm, tk), lambda i, j, kk: (i, kk)),   # x tile
                pl.BlockSpec((tk, tn), lambda i, j, kk: (kk, j)),   # W_h tile
                pl.BlockSpec((tk, tn), lambda i, j, kk: (kk, j)),   # W_z tile
                pl.BlockSpec((1, tn), lambda i, j, kk: (0, j)),     # b_h tile
                pl.BlockSpec((1, tn), lambda i, j, kk: (0, j)),     # b_z tile
            ],
            out_specs=pl.BlockSpec((tm, tn), lambda i, j, kk: (i, j)),
            scratch_shapes=[
                pltpu.VMEM((tm, tn), jnp.float32),  # htilde accumulator
                pltpu.VMEM((tm, tn), jnp.float32),  # z accumulator
            ],
        ),
        compiler_params=pltpu.CompilerParams(
            dimension_semantics=("parallel", "parallel", "arbitrary"),
        ),
        cost_estimate=cost,
    )(x_p, wh_p, wz_p, bh_p, bz_p)

    return out[:m, :h].reshape(*orig_shape[:-1], h)


def init_params(key, input_size, hidden_size, dtype=jnp.float32):
    """Deterministic init mimicking nn.Linear's U(-1/sqrt(in), 1/sqrt(in))."""
    k1, k2, k3, k4 = jax.random.split(key, 4)
    bound = 1.0 / (input_size ** 0.5)
    # Store weights pre-transposed: (input_size, hidden_size).
    wh_t = jax.random.uniform(k1, (input_size, hidden_size), dtype, -bound, bound)
    bh = jax.random.uniform(k2, (hidden_size,), dtype, -bound, bound)
    wz_t = jax.random.uniform(k3, (input_size, hidden_size), dtype, -bound, bound)
    bz = jax.random.uniform(k4, (hidden_size,), dtype, -bound, bound)
    return wh_t, bh, wz_t, bz


if __name__ == "__main__":
    key = jax.random.PRNGKey(0)
    kx, kp = jax.random.split(key)

    batch, seq, input_size, hidden_size = 2, 8, 32, 32
    x = jax.random.normal(kx, (batch, seq, input_size), dtype=jnp.float32)
    wh_t, bh, wz_t, bz = init_params(kp, input_size, hidden_size)

    # Parameter prep (pad + layout) happens once, off the per-call path.
    params = prepare_params(wh_t, bh, wz_t, bz)

    out = mingru_forward(x, *params, hidden_size=hidden_size)
    out = jax.block_until_ready(out)

    # Pure-JAX reference check of the same math (same TPU default precision).
    ref = jax.nn.sigmoid(x @ wz_t + bz) * (x @ wh_t + bh)
    assert out.shape == (batch, seq, hidden_size)
    assert jnp.allclose(out, ref, atol=1e-5, rtol=1e-5)

    print("KERNEL_OK")
</pallas_src>

<mosaic_0001>
module attributes {stable_mosaic.version = 11 : i64} {
  func.func @_mingru_kernel(%arg0: i32, %arg1: i32, %arg2: i32, %arg3: memref<8x128xf32, #tpu.memory_space<vmem>>, %arg4: memref<128x128xf32, #tpu.memory_space<vmem>>, %arg5: memref<128x128xf32, #tpu.memory_space<vmem>>, %arg6: memref<1x128xf32, #tpu.memory_space<vmem>>, %arg7: memref<1x128xf32, #tpu.memory_space<vmem>>, %arg8: memref<8x128xf32, #tpu.memory_space<vmem>>, %arg9: memref<8x128xf32, #tpu.memory_space<vmem>>, %arg10: memref<8x128xf32, #tpu.memory_space<vmem>>) attributes {dimension_semantics = [#tpu.dimension_semantics<parallel>, #tpu.dimension_semantics<parallel>, #tpu.dimension_semantics<arbitrary>], iteration_bounds = array<i64: 2, 1, 1>, scalar_prefetch = 0 : i64, scratch_operands = 2 : i64, tpu.core_type = #tpu.core_type<tc>, window_params = [{transform_indices = @transform_0, window_bounds = array<i64: 8, 128>}, {transform_indices = @transform_1, window_bounds = array<i64: 128, 128>}, {transform_indices = @transform_2, window_bounds = array<i64: 128, 128>}, {transform_indices = @transform_3, window_bounds = array<i64: 1, 128>}, {transform_indices = @transform_4, window_bounds = array<i64: 1, 128>}, {transform_indices = @transform_5, window_bounds = array<i64: 8, 128>}]} {
    %c0_i32 = arith.constant 0 : i32
    %0 = arith.cmpi eq, %arg2, %c0_i32 : i32
    %1 = arith.extui %0 : i1 to i32
    %c0_i32_0 = arith.constant 0 : i32
    %2 = arith.cmpi ne, %1, %c0_i32_0 : i32
    scf.if %2 {
      %cst_17 = arith.constant 0.000000e+00 : f32
      %17 = vector.broadcast %cst_17 : f32 to vector<8x128xf32>
      %c0_18 = arith.constant 0 : index
      %c0_19 = arith.constant 0 : index
      %18 = vector.load %arg9[%c0_18, %c0_19] : memref<8x128xf32, #tpu.memory_space<vmem>>, vector<8x128xf32>
      tpu.vector_store %arg9[%c0_18, %c0_19], %17 {strides = array<i32>} : memref<8x128xf32, #tpu.memory_space<vmem>>, vector<8x128xf32>,
      %cst_20 = arith.constant 0.000000e+00 : f32
      %19 = vector.broadcast %cst_20 : f32 to vector<8x128xf32>
      %c0_21 = arith.constant 0 : index
      %c0_22 = arith.constant 0 : index
      %20 = vector.load %arg10[%c0_21, %c0_22] : memref<8x128xf32, #tpu.memory_space<vmem>>, vector<8x128xf32>
      tpu.vector_store %arg10[%c0_21, %c0_22], %19 {strides = array<i32>} : memref<8x128xf32, #tpu.memory_space<vmem>>, vector<8x128xf32>,
    } else {
    }
    %c0 = arith.constant 0 : index
    %c0_1 = arith.constant 0 : index
    %3 = vector.load %arg3[%c0, %c0_1] : memref<8x128xf32, #tpu.memory_space<vmem>>, vector<8x128xf32>
    %c0_2 = arith.constant 0 : index
    %c0_3 = arith.constant 0 : index
    %4 = vector.load %arg9[%c0_2, %c0_3] : memref<8x128xf32, #tpu.memory_space<vmem>>, vector<8x128xf32>
    %c0_4 = arith.constant 0 : index
    %c0_5 = arith.constant 0 : index
    %5 = vector.load %arg4[%c0_4, %c0_5] : memref<128x128xf32, #tpu.memory_space<vmem>>, vector<128x128xf32>
    %cst = arith.constant dense<0.000000e+00> : vector<8x128xf32>
    %6 = tpu.matmul %3, %5, %cst {dimension_numbers = #tpu.dot_dimension_numbers<[1], [0], [0], [1], [0, 0, 1, 1], [], []>} : vector<8x128xf32>, vector<128x128xf32>, vector<8x128xf32> -> vector<8x128xf32>
    %7 = arith.addf %4, %6 : vector<8x128xf32>
    %c0_6 = arith.constant 0 : index
    %c0_7 = arith.constant 0 : index
    %8 = vector.load %arg9[%c0_6, %c0_7] : memref<8x128xf32, #tpu.memory_space<vmem>>, vector<8x128xf32>
    tpu.vector_store %arg9[%c0_6, %c0_7], %7 {strides = array<i32>} : memref<8x128xf32, #tpu.memory_space<vmem>>, vector<8x128xf32>,
    %c0_8 = arith.constant 0 : index
    %c0_9 = arith.constant 0 : index
    %9 = vector.load %arg10[%c0_8, %c0_9] : memref<8x128xf32, #tpu.memory_space<vmem>>, vector<8x128xf32>
    %c0_10 = arith.constant 0 : index
    %c0_11 = arith.constant 0 : index
    %10 = vector.load %arg5[%c0_10, %c0_11] : memref<128x128xf32, #tpu.memory_space<vmem>>, vector<128x128xf32>
    %cst_12 = arith.constant dense<0.000000e+00> : vector<8x128xf32>
    %11 = tpu.matmul %3, %10, %cst_12 {dimension_numbers = #tpu.dot_dimension_numbers<[1], [0], [0], [1], [0, 0, 1, 1], [], []>} : vector<8x128xf32>, vector<128x128xf32>, vector<8x128xf32> -> vector<8x128xf32>
    %12 = arith.addf %9, %11 : vector<8x128xf32>
    %c0_13 = arith.constant 0 : index
    %c0_14 = arith.constant 0 : index
    %13 = vector.load %arg10[%c0_13, %c0_14] : memref<8x128xf32, #tpu.memory_space<vmem>>, vector<8x128xf32>
    tpu.vector_store %arg10[%c0_13, %c0_14], %12 {strides = array<i32>} : memref<8x128xf32, #tpu.memory_space<vmem>>, vector<8x128xf32>,
    %c0_i32_15 = arith.constant 0 : i32
    %14 = arith.cmpi eq, %arg2, %c0_i32_15 : i32
    %15 = arith.extui %14 : i1 to i32
    %c0_i32_16 = arith.constant 0 : i32
    %16 = arith.cmpi ne, %15, %c0_i32_16 : i32
    scf.if %16 {
      %c0_17 = arith.constant 0 : index
      %c0_18 = arith.constant 0 : index
      %17 = vector.load %arg9[%c0_17, %c0_18] : memref<8x128xf32, #tpu.memory_space<vmem>>, vector<8x128xf32>
      %c0_19 = arith.constant 0 : index
      %c0_20 = arith.constant 0 : index
      %18 = vector.load %arg6[%c0_19, %c0_20] : memref<1x128xf32, #tpu.memory_space<vmem>>, vector<1x128xf32>
      %19 = vector.broadcast %18 : vector<1x128xf32> to vector<8x128xf32>
      %20 = arith.addf %17, %19 : vector<8x128xf32>
      %c0_21 = arith.constant 0 : index
      %c0_22 = arith.constant 0 : index
      %21 = vector.load %arg10[%c0_21, %c0_22] : memref<8x128xf32, #tpu.memory_space<vmem>>, vector<8x128xf32>
      %c0_23 = arith.constant 0 : index
      %c0_24 = arith.constant 0 : index
      %22 = vector.load %arg7[%c0_23, %c0_24] : memref<1x128xf32, #tpu.memory_space<vmem>>, vector<1x128xf32>
      %23 = vector.broadcast %22 : vector<1x128xf32> to vector<8x128xf32>
      %24 = arith.addf %21, %23 : vector<8x128xf32>
      %25 = arith.negf %24 : vector<8x128xf32>
      %26 = math.exp %25 : vector<8x128xf32>
      %cst_25 = arith.constant 1.000000e+00 : f32
      %27 = vector.broadcast %cst_25 : f32 to vector<8x128xf32>
      %28 = arith.addf %27, %26 : vector<8x128xf32>
      %29 = arith.divf %27, %28 : vector<8x128xf32>
      %30 = arith.mulf %29, %20 : vector<8x128xf32>
      %c0_26 = arith.constant 0 : index
      %c0_27 = arith.constant 0 : index
      %31 = vector.load %arg8[%c0_26, %c0_27] : memref<8x128xf32, #tpu.memory_space<vmem>>, vector<8x128xf32>
      tpu.vector_store %arg8[%c0_26, %c0_27], %30 {strides = array<i32>} : memref<8x128xf32, #tpu.memory_space<vmem>>, vector<8x128xf32>,
    } else {
    }
    return
  }
  func.func @transform_0(%arg0: i32, %arg1: i32, %arg2: i32) -> (i32, i32) {
    %c0_i32 = arith.constant 0 : i32
    return %arg0, %arg2 : i32, i32
  }
  func.func @transform_1(%arg0: i32, %arg1: i32, %arg2: i32) -> (i32, i32) {
    %c0_i32 = arith.constant 0 : i32
    return %arg2, %arg1 : i32, i32
  }
  func.func @transform_2(%arg0: i32, %arg1: i32, %arg2: i32) -> (i32, i32) {
    %c0_i32 = arith.constant 0 : i32
    return %arg2, %arg1 : i32, i32
  }
  func.func @transform_3(%arg0: i32, %arg1: i32, %arg2: i32) -> (i32, i32) {
    %c0_i32 = arith.constant 0 : i32
    %c0_i32_0 = arith.constant 0 : i32
    return %c0_i32, %arg1 : i32, i32
  }
  func.func @transform_4(%arg0: i32, %arg1: i32, %arg2: i32) -> (i32, i32) {
    %c0_i32 = arith.constant 0 : i32
    %c0_i32_0 = arith.constant 0 : i32
    return %c0_i32, %arg1 : i32, i32
  }
  func.func @transform_5(%arg0: i32, %arg1: i32, %arg2: i32) -> (i32, i32) {
    %c0_i32 = arith.constant 0 : i32
    return %arg0, %arg1 : i32, i32
  }
}

</mosaic_0001>

<llo_original>
// kernel: mingru_forward.1
$region0: #{mingru_forward.1}
  #allocation0 [shape = 'u32[]', space=smem, size = 0x4, offset = 0x4, fixed_abs, tag = 'smem constant byte address 0x4 - core index']
  #allocation1 [shape = 'u32[144,128]{1,0:T(1,128)}', space=vmem, size = 0x12000, scoped, tag = 'internal scratch']
  #allocation2 [shape = 'f32[8,128]{1,0:T(8,128)}', space=vmem, size = 0x1000, scoped, tag = 'scratch operand']
  #allocation3 [shape = 'f32[8,128]{1,0:T(8,128)}', space=vmem, size = 0x1000, scoped, tag = 'scratch operand']
  %s0 = inlined_call_operand.vmem [shape: f32[16,128], index: 0, kind: input, shape index: {}]
  %s1 = inlined_call_operand.hbm [shape: f32[128,128], index: 1, kind: input, shape index: {}]
  %s2 = inlined_call_operand.hbm [shape: f32[128,128], index: 2, kind: input, shape index: {}]
  %s3 = inlined_call_operand.vmem [shape: f32[1,128], index: 3, kind: input, shape index: {}]
  %s4 = inlined_call_operand.vmem [shape: f32[1,128], index: 4, kind: input, shape index: {}]
  %s5 = inlined_call_operand.vmem [shape: f32[16,128], index: 5, kind: output, shape index: {}]
  %s6 = sld [smem:[#allocation0]]
  $region69: #{mingru_forward.1} parent=0
    _
  %s8 = ssub.s32 1, %s6
  %s9 = scalar_select 0, %s8, %s6
  $region1: #{mingru_forward.1} parent=0
    #allocation4 [shape = 'u8[65536]{0}', space=vmem, size = 0x10000, scoped, tag = 'input window, operand 1, single buffered']
    #allocation5 [shape = 's32[2]{0}', space=sflag, size = 0x8, scoped, tag = 'scoped memory for mingru_forward.1']
    #allocation6 [shape = 'u8[65536]{0}', space=vmem, size = 0x10000, scoped, tag = 'input window, operand 2, single buffered']
    #allocation7 [shape = 's32[1]{0}', space=sflag, size = 0x4, scoped, tag = 'scoped memory for mingru_forward.1']
    %10 = vsyncpa [#allocation5], 0
    %11 = vsyncpa [#allocation7], 0
    loop: start=0, step=1, limit=4
    $region2: #{mingru_forward.1} parent=1 // loop_pre_header
      _
    $region3: #{mingru_forward.1} parent=1 // loop_header
      %s13 = sphi 0, %s17
      %p14 = scmp.ge.s32.totalorder %s13, 4
      %s20 = sphi 0, %s39
      %s21 = sphi 0, %s35
      %s22 = sphi 0, %s31
      %s23 = sphi 0, %s20
      %s24 = sphi 0, %s21
      %s25 = sphi 0, %s22
      %s26 = sphi 0, %s23
      %s27 = sphi 0, %s24
      %s28 = sphi 0, %s25
      %s44 = sphi 0, %s46
      %s47 = sphi 0, %s44
      %s48 = sphi 0, %s47
      %s64 = sphi 0, %s48
      %s72 = sphi 0, %s74
      %s75 = sphi 0, %s72
      %s76 = sphi 0, %s75
      %s92 = sphi 0, %s76
      %s100 = sphi 0, %s102
      %s103 = sphi 0, %s100
      %s104 = sphi 0, %s103
      %s120 = sphi 0, %s104
      %s126 = sphi 0, %s128
      %s129 = sphi 0, %s126
      %s130 = sphi 0, %s129
      %s146 = sphi 0, %s130
      %s152 = sphi 0, %s154
      %s155 = sphi 0, %s152
      %s156 = sphi 0, %s155
      %s172 = sphi 0, %s156
      %s180 = sphi 0, %s182
      %s183 = sphi 0, %s180
      %s184 = sphi 0, %s183
      %s200 = sphi 0, %s184
    $region4: #{mingru_forward.1} parent=1 // loop_header_branch
      %16 = sbr.rel (%p14) target = $region8
    $region5: #{mingru_forward.1} parent=1 // loop_body
      %s18 = ssub.s32 %s13, 1
      %s19 = ssub.s32 %s13, 2
      %s29 = sadd.s32 1, %s22
      %p30 = scmp.ge.s32.totalorder %s29, 1
      %s31 = scalar_select %p30, 0, %s29
      %s32 = sadd.s32 1, %s21
      %s33 = scalar_select %p30, %s32, %s21
      %p34 = scmp.ge.s32.totalorder %s33, 1
      %s35 = scalar_select %p34, 0, %s33
      %s36 = sadd.s32 1, %s20
      %s37 = scalar_select %p34, %s36, %s20
      %p38 = scmp.ge.s32.totalorder %s37, 2
      %s39 = scalar_select %p38, 0, %s37
      %s40 = ssub.s32 %s20, %s39
      %s41 = ssub.s32 %s22, %s31
      %s42 = sor.u32 %s40, %s41
      %p43 = scmp.eq.s32.totalorder %s42, 0
      %s45 = sadd.s32 %s44, 1
      %s46 = scalar_select %p43, %s44, %s45
      %p49 = pneg %p43
      %p50 = scmp.eq.s32.totalorder %s13, 1
      %p51 = por %p49, %p50
      %p52 = scmp.ne.s32.totalorder %s44, %s47
      %p53 = scmp.eq.s32.totalorder %s13, 0
      %p54 = por %p52, %p53
      %p55 = scmp.ne.s32.totalorder %s44, %s47
      %p56 = scmp.eq.s32.totalorder %s18, 1
      %p57 = por %p55, %p56
      %p58 = scmp.ne.s32.totalorder %s47, %s48
      %p59 = scmp.eq.s32.totalorder %s18, 0
      %p60 = por %p58, %p59
      %p61 = scmp.ne.s32.totalorder %s47, %s48
      %p62 = scmp.eq.s32.totalorder %s19, 1
      %p63 = por %p61, %p62
      %p65 = scmp.ne.s32.totalorder %s48, %s64
      %p66 = scmp.eq.s32.totalorder %s19, 0
      %p67 = por %p65, %p66
      %s68 = ssub.s32 %s22, %s31
      %s69 = ssub.s32 %s21, %s35
      %s70 = sor.u32 %s68, %s69
      %p71 = scmp.eq.s32.totalorder %s70, 0
      %s73 = sadd.s32 %s72, 1
      %s74 = scalar_select %p71, %s72, %s73
      %p77 = pneg %p71
      %p78 = scmp.eq.s32.totalorder %s13, 1
      %p79 = por %p77, %p78
      %p80 = scmp.ne.s32.totalorder %s72, %s75
      %p81 = scmp.eq.s32.totalorder %s13, 0
      %p82 = por %p80, %p81
      %p83 = scmp.ne.s32.totalorder %s72, %s75
      %p84 = scmp.eq.s32.totalorder %s18, 1
      %p85 = por %p83, %p84
      %p86 = scmp.ne.s32.totalorder %s75, %s76
      %p87 = scmp.eq.s32.totalorder %s18, 0
      %p88 = por %p86, %p87
      %p89 = scmp.ne.s32.totalorder %s75, %s76
      %p90 = scmp.eq.s32.totalorder %s19, 1
      %p91 = por %p89, %p90
      %p93 = scmp.ne.s32.totalorder %s76, %s92
      %p94 = scmp.eq.s32.totalorder %s19, 0
      %p95 = por %p93, %p94
      %s96 = ssub.s32 %s22, %s31
      %s97 = ssub.s32 %s21, %s35
      %s98 = sor.u32 %s96, %s97
      %p99 = scmp.eq.s32.totalorder %s98, 0
      %s101 = sadd.s32 %s100, 1
      %s102 = scalar_select %p99, %s100, %s101
      %p105 = pneg %p99
      %p106 = scmp.eq.s32.totalorder %s13, 1
      %p107 = por %p105, %p106
      %p108 = scmp.ne.s32.totalorder %s100, %s103
      %p109 = scmp.eq.s32.totalorder %s13, 0
      %p110 = por %p108, %p109
      %p111 = scmp.ne.s32.totalorder %s100, %s103
      %p112 = scmp.eq.s32.totalorder %s18, 1
      %p113 = por %p111, %p112
      %p114 = scmp.ne.s32.totalorder %s103, %s104
      %p115 = scmp.eq.s32.totalorder %s18, 0
      %p116 = por %p114, %p115
      %p117 = scmp.ne.s32.totalorder %s103, %s104
      %p118 = scmp.eq.s32.totalorder %s19, 1
      %p119 = por %p117, %p118
      %p121 = scmp.ne.s32.totalorder %s104, %s120
      %p122 = scmp.eq.s32.totalorder %s19, 0
      %p123 = por %p121, %p122
      %s124 = ssub.s32 %s21, %s35
      %p125 = scmp.eq.s32.totalorder %s124, 0
      %s127 = sadd.s32 %s126, 1
      %s128 = scalar_select %p125, %s126, %s127
      %p131 = pneg %p125
      %p132 = scmp.eq.s32.totalorder %s13, 1
      %p133 = por %p131, %p132
      %p134 = scmp.ne.s32.totalorder %s126, %s129
      %p135 = scmp.eq.s32.totalorder %s13, 0
      %p136 = por %p134, %p135
      %p137 = scmp.ne.s32.totalorder %s126, %s129
      %p138 = scmp.eq.s32.totalorder %s18, 1
      %p139 = por %p137, %p138
      %p140 = scmp.ne.s32.totalorder %s129, %s130
      %p141 = scmp.eq.s32.totalorder %s18, 0
      %p142 = por %p140, %p141
      %p143 = scmp.ne.s32.totalorder %s129, %s130
      %p144 = scmp.eq.s32.totalorder %s19, 1
      %p145 = por %p143, %p144
      %p147 = scmp.ne.s32.totalorder %s130, %s146
      %p148 = scmp.eq.s32.totalorder %s19, 0
      %p149 = por %p147, %p148
      %s150 = ssub.s32 %s21, %s35
      %p151 = scmp.eq.s32.totalorder %s150, 0
      %s153 = sadd.s32 %s152, 1
      %s154 = scalar_select %p151, %s152, %s153
      %p157 = pneg %p151
      %p158 = scmp.eq.s32.totalorder %s13, 1
      %p159 = por %p157, %p158
      %p160 = scmp.ne.s32.totalorder %s152, %s155
      %p161 = scmp.eq.s32.totalorder %s13, 0
      %p162 = por %p160, %p161
      %p163 = scmp.ne.s32.totalorder %s152, %s155
      %p164 = scmp.eq.s32.totalorder %s18, 1
      %p165 = por %p163, %p164
      %p166 = scmp.ne.s32.totalorder %s155, %s156
      %p167 = scmp.eq.s32.totalorder %s18, 0
      %p168 = por %p166, %p167
      %p169 = scmp.ne.s32.totalorder %s155, %s156
      %p170 = scmp.eq.s32.totalorder %s19, 1
      %p171 = por %p169, %p170
      %p173 = scmp.ne.s32.totalorder %s156, %s172
      %p174 = scmp.eq.s32.totalorder %s19, 0
      %p175 = por %p173, %p174
      %s176 = ssub.s32 %s20, %s39
      %s177 = ssub.s32 %s21, %s35
      %s178 = sor.u32 %s176, %s177
      %p179 = scmp.eq.s32.totalorder %s178, 0
      %s181 = sadd.s32 %s180, 1
      %s182 = scalar_select %p179, %s180, %s181
      %p185 = pneg %p179
      %p186 = scmp.eq.s32.totalorder %s13, 1
      %p187 = por %p185, %p186
      %p188 = scmp.ne.s32.totalorder %s180, %s183
      %p189 = scmp.eq.s32.totalorder %s13, 0
      %p190 = por %p188, %p189
      %p191 = scmp.ne.s32.totalorder %s180, %s183
      %p192 = scmp.eq.s32.totalorder %s18, 1
      %p193 = por %p191, %p192
      %p194 = scmp.ne.s32.totalorder %s183, %s184
      %p195 = scmp.eq.s32.totalorder %s18, 0
      %p196 = por %p194, %p195
      %p197 = scmp.ne.s32.totalorder %s183, %s184
      %p198 = scmp.eq.s32.totalorder %s19, 1
      %p199 = por %p197, %p198
      %p201 = scmp.ne.s32.totalorder %s184, %s200
      %p202 = scmp.eq.s32.totalorder %s19, 0
      %p203 = por %p201, %p202
      %p204 = scmp.le.s32.totalorder 1, %s13
      %p205 = scmp.lt.s32.totalorder %s13, 3
      %p206 = pnand %p204, %p205
      %p207 = pneg %p206
      // Predicated region
      $region9: #{mingru_forward.1} parent=5 // pred_check
        _
      $region10: #{mingru_forward.1} parent=5 // pred_check_branch
        %209 = sbr.rel (%p206) target = $region12
      $region11: #{mingru_forward.1} parent=5 // pred_region
        %s210 = ssub.s32 %s13, 1
        // Predicated region
        $region13: #{mingru_forward.1} parent=11 // pred_check
          %p211 = pneg %p88
        $region14: #{mingru_forward.1} parent=11 // pred_check_branch
          %213 = sbr.rel (%p211) target = $region16
        $region15: #{mingru_forward.1} parent=11 // pred_region
          %s214 = smul.u32 16, %s25
          %s216 = ssub.s32 2048, 2048
          %217 = vsyncadd [#allocation5], %s216
          %s218 = sadd.s32 %s24, %s214
          %s219 = smul.addr %s218, 128
          %s220 = scalar_lea.hbm %s1, %s219
          %s221 = sshll.u32 [#allocation4], 4
          %s222 = int_to_ptr.vmem [resolvable:$true] %s221
          %227 = dma.hbm_to_vmem [thread:$0]  %s220, 2048, %s222, [#allocation5], 128, 128, 8
        $region16: #{mingru_forward.1} parent=11 // pred_fallthru
          _
        // Predicated region
        $region17: #{mingru_forward.1} parent=11 // pred_check
          %p228 = pneg %p116
        $region18: #{mingru_forward.1} parent=11 // pred_check_branch
          %230 = sbr.rel (%p228) target = $region20
        $region19: #{mingru_forward.1} parent=11 // pred_region
          %s231 = smul.u32 16, %s25
          %s233 = ssub.s32 2048, 2048
          %234 = vsyncadd [#allocation7], %s233
          %s235 = sadd.s32 %s24, %s231
          %s236 = smul.addr %s235, 128
          %s237 = scalar_lea.hbm %s2, %s236
          %s238 = sshll.u32 [#allocation6], 4
          %s239 = int_to_ptr.vmem [resolvable:$true] %s238
          %244 = dma.hbm_to_vmem [thread:$0]  %s237, 2048, %s239, [#allocation7], 128, 128, 8
        $region20: #{mingru_forward.1} parent=11 // pred_fallthru
          _
        // Predicated region
        $region21: #{mingru_forward.1} parent=11 // pred_check
          %p245 = pneg %p142
        $region22: #{mingru_forward.1} parent=11 // pred_check_branch
          %247 = sbr.rel (%p245) target = $region24
        $region23: #{mingru_forward.1} parent=11 // pred_region
          %p248 = scmp.lt.s32.totalorder %s24, 0
          %s249 = scalar_select %p248, %s24, 0
          %s250 = scalar_lea.vmem %s3, %s249
        $region24: #{mingru_forward.1} parent=11 // pred_fallthru
          _
        // Predicated region
        $region25: #{mingru_forward.1} parent=11 // pred_check
          %p251 = pneg %p168
        $region26: #{mingru_forward.1} parent=11 // pred_check_branch
          %253 = sbr.rel (%p251) target = $region28
        $region27: #{mingru_forward.1} parent=11 // pred_region
          %p254 = scmp.lt.s32.totalorder %s24, 0
          %s255 = scalar_select %p254, %s24, 0
          %s256 = scalar_lea.vmem %s4, %s255
        $region28: #{mingru_forward.1} parent=11 // pred_fallthru
          _
      $region12: #{mingru_forward.1} parent=5 // pred_fallthru
        _
      %p257 = scmp.lt.s32.totalorder %s13, 2
      // Predicated region
      $region29: #{mingru_forward.1} parent=5 // pred_check
        %p258 = pneg %p257
      $region30: #{mingru_forward.1} parent=5 // pred_check_branch
        %260 = sbr.rel (%p258) target = $region32
      $region31: #{mingru_forward.1} parent=5 // pred_region
        // Predicated region
        $region33: #{mingru_forward.1} parent=31 // pred_check
          %p261 = pneg %p54
        $region34: #{mingru_forward.1} parent=31 // pred_check_branch
          %263 = sbr.rel (%p261) target = $region36
        $region35: #{mingru_forward.1} parent=31 // pred_region
          %p264 = scmp.lt.s32.totalorder %s20, 1
          %s265 = scalar_select %p264, %s20, 1
          %p266 = scmp.lt.s32.totalorder %s22, 0
          %s267 = scalar_select %p266, %s22, 0
          %s268 = sadd.s32 %s267, %s265
          %s269 = smul.addr %s268, 8
          %s270 = scalar_lea.vmem %s0, %s269
        $region36: #{mingru_forward.1} parent=31 // pred_fallthru
          _
      $region32: #{mingru_forward.1} parent=5 // pred_fallthru
        _
      %p271 = scmp.le.s32.totalorder 1, %s13
      %p272 = scmp.lt.s32.totalorder %s13, 3
      %p273 = pnand %p271, %p272
      %p274 = pneg %p273
      // Predicated region
      $region37: #{mingru_forward.1} parent=5 // pred_check
        _
      $region38: #{mingru_forward.1} parent=5 // pred_check_branch
        %276 = sbr.rel (%p273) target = $region40
      $region39: #{mingru_forward.1} parent=5 // pred_region
        %s277 = ssub.s32 %s13, 1
        // Predicated region
        $region41: #{mingru_forward.1} parent=39 // pred_check
          %p278 = pneg %p88
        $region42: #{mingru_forward.1} parent=39 // pred_check_branch
          %280 = sbr.rel (%p278) target = $region44
        $region43: #{mingru_forward.1} parent=39 // pred_region
          %281 = dma.done [#allocation5], 2048
        $region44: #{mingru_forward.1} parent=39 // pred_fallthru
          _
        // Predicated region
        $region45: #{mingru_forward.1} parent=39 // pred_check
          %p282 = pneg %p116
        $region46: #{mingru_forward.1} parent=39 // pred_check_branch
          %284 = sbr.rel (%p282) target = $region48
        $region47: #{mingru_forward.1} parent=39 // pred_region
          %285 = dma.done [#allocation7], 2048
        $region48: #{mingru_forward.1} parent=39 // pred_fallthru
          _
        %p286 = scmp.lt.s32.totalorder %s23, 1
        %s287 = scalar_select %p286, %s23, 1
        %p288 = scmp.lt.s32.totalorder %s25, 0
        %s289 = scalar_select %p288, %s25, 0
        %s290 = sadd.s32 %s289, %s287
        %s291 = smul.addr %s290, 8
        %s292 = scalar_lea.vmem %s0, %s291
        %p293 = pneg %p60
        %p294 = pneg %p57
        %p295 = pneg %p88
        %p296 = pneg %p85
        %p297 = pneg %p116
        %p298 = pneg %p113
        %p299 = scmp.lt.s32.totalorder %s24, 0
        %s300 = scalar_select %p299, %s24, 0
        %s301 = scalar_lea.vmem %s3, %s300
        %p302 = pneg %p142
        %p303 = pneg %p139
        %p304 = scmp.lt.s32.totalorder %s24, 0
        %s305 = scalar_select %p304, %s24, 0
        %s306 = scalar_lea.vmem %s4, %s305
        %p307 = pneg %p168
        %p308 = pneg %p165
        %p309 = pneg %p196
        %p310 = pneg %p193
        %p311 = scmp.lt.s32.totalorder %s23, 1
        %s312 = scalar_select %p311, %s23, 1
        %p313 = scmp.lt.s32.totalorder %s24, 0
        %s314 = scalar_select %p313, %s24, 0
        %s315 = sadd.s32 %s314, %s312
        %s316 = smul.addr %s315, 8
        %s317 = scalar_lea.vmem %s5, %s316
        %p318 = scmp.lt.s32.totalorder %s23, 1
        %s319 = scalar_select %p318, %s23, 1
        %p320 = scmp.lt.s32.totalorder %s25, 0
        %s321 = scalar_select %p320, %s25, 0
        %s322 = sadd.s32 %s321, %s319
        %s323 = smul.addr %s322, 8
        %s324 = scalar_lea.vmem %s0, %s323
        %s325 = smul.u32 16, %s25
        %s326 = smul.u32 16, %s25
        %p327 = scmp.lt.s32.totalorder %s24, 0
        %s328 = scalar_select %p327, %s24, 0
        %s329 = scalar_lea.vmem %s3, %s328
        %p330 = scmp.lt.s32.totalorder %s24, 0
        %s331 = scalar_select %p330, %s24, 0
        %s332 = scalar_lea.vmem %s4, %s331
        %p333 = scmp.lt.s32.totalorder %s23, 1
        %s334 = scalar_select %p333, %s23, 1
        %p335 = scmp.lt.s32.totalorder %s24, 0
        %s336 = scalar_select %p335, %s24, 0
        %s337 = sadd.s32 %s336, %s334
        %s338 = smul.addr %s337, 8
        %s339 = scalar_lea.vmem %s5, %s338
        %p340 = scmp.eq.s32.totalorder %s25, 0
        // Predicated region
        $region49: #{mingru_forward.1} parent=39 // pred_check
          %p341 = pneg %p340
        $region50: #{mingru_forward.1} parent=39 // pred_check_branch
          %343 = sbr.rel (%p341) target = $region52
        $region51: #{mingru_forward.1} parent=39 // pred_region
          %344 = vst [vmem:[#allocation2] sm:$0xff] 0.0
          %345 = vst [vmem:[#allocation3] sm:$0xff] 0.0
        $region52: #{mingru_forward.1} parent=39 // pred_fallthru
          _
        %v346 = vld [vmem:[%s324] sm:$0xff]
        %v347 = vld [vmem:[#allocation2] sm:$0xff]
        %v348 = vld [vmem:[#allocation4] sm:$0xff]
        %v349 = vld [vmem:[#allocation4 + $0x8] sm:$0xff]
        %v350 = vld [vmem:[#allocation4 + $0x10] sm:$0xff]
        %v351 = vld [vmem:[#allocation4 + $0x18] sm:$0xff]
        %v352 = vld [vmem:[#allocation4 + $0x20] sm:$0xff]
        %v353 = vld [vmem:[#allocation4 + $0x28] sm:$0xff]
        %v354 = vld [vmem:[#allocation4 + $0x30] sm:$0xff]
        %v355 = vld [vmem:[#allocation4 + $0x38] sm:$0xff]
        %v356 = vld [vmem:[#allocation4 + $0x40] sm:$0xff]
        %v357 = vld [vmem:[#allocation4 + $0x48] sm:$0xff]
        %v358 = vld [vmem:[#allocation4 + $0x50] sm:$0xff]
        %v359 = vld [vmem:[#allocation4 + $0x58] sm:$0xff]
        %v360 = vld [vmem:[#allocation4 + $0x60] sm:$0xff]
        %v361 = vld [vmem:[#allocation4 + $0x68] sm:$0xff]
        %v362 = vld [vmem:[#allocation4 + $0x70] sm:$0xff]
        %v363 = vld [vmem:[#allocation4 + $0x78] sm:$0xff]
        %364 = vmatprep.subr.mxu0 0.0
        %365 = vmatpush1.msra.mxu0 %v348
        %366 = vmatprep.subr.mxu0 0.0
        %367 = vmatpush1.msra.mxu0 %v349
        %368 = vmatprep.subr.mxu0 0.0
        %369 = vmatpush1.msra.mxu0 %v350
        %370 = vmatprep.subr.mxu0 0.0
        %371 = vmatpush1.msra.mxu0 %v351
        %372 = vmatprep.subr.mxu0 0.0
        %373 = vmatpush1.msra.mxu0 %v352
        %374 = vmatprep.subr.mxu0 0.0
        %375 = vmatpush1.msra.mxu0 %v353
        %376 = vmatprep.subr.mxu0 0.0
        %377 = vmatpush1.msra.mxu0 %v354
        %378 = vmatprep.subr.mxu0 0.0
        %379 = vmatpush1.msra.mxu0 %v355
        %380 = vmatprep.subr.mxu0 0.0
        %381 = vmatpush1.msra.mxu0 %v356
        %382 = vmatprep.subr.mxu0 0.0
        %383 = vmatpush1.msra.mxu0 %v357
        %384 = vmatprep.subr.mxu0 0.0
        %385 = vmatpush1.msra.mxu0 %v358
        %386 = vmatprep.subr.mxu0 0.0
        %387 = vmatpush1.msra.mxu0 %v359
        %388 = vmatprep.subr.mxu0 0.0
        %389 = vmatpush1.msra.mxu0 %v360
        %390 = vmatprep.subr.mxu0 0.0
        %391 = vmatpush1.msra.mxu0 %v361
        %392 = vmatprep.subr.mxu0 0.0
        %393 = vmatpush1.msra.mxu0 %v362
        %394 = vmatprep.subr.mxu0 0.0
        %395 = vmatpush1.msra.mxu0 %v363
        %396 = vmatprep.subr.mxu0 0.0
        %397 = vmatpush1.msra.mxu0 0.0
        %398 = vmatprep.subr.mxu0 0.0
        %399 = vmatpush1.msra.mxu0 0.0
        %400 = vmatprep.subr.mxu0 0.0
        %401 = vmatpush1.msra.mxu0 0.0
        %402 = vmatprep.subr.mxu0 0.0
        %403 = vmatpush1.msra.mxu0 0.0
        %404 = vmatprep.subr.mxu0 0.0
        %405 = vmatpush1.msra.mxu0 0.0
        %406 = vmatprep.subr.mxu0 0.0
        %407 = vmatpush1.msra.mxu0 0.0
        %408 = vmatprep.subr.mxu0 0.0
        %409 = vmatpush1.msra.mxu0 0.0
        %410 = vmatprep.subr.mxu0 0.0
        %411 = vmatpush1.msra.mxu0 0.0
        %412 = vmatprep.subr.mxu0 0.0
        %413 = vmatpush1.msra.mxu0 0.0
        %414 = vmatprep.subr.mxu0 0.0
        %415 = vmatpush1.msra.mxu0 0.0
        %416 = vmatprep.subr.mxu0 0.0
        %417 = vmatpush1.msra.mxu0 0.0
        %418 = vmatprep.subr.mxu0 0.0
        %419 = vmatpush1.msra.mxu0 0.0
        %420 = vmatprep.subr.mxu0 0.0
        %421 = vmatpush1.msra.mxu0 0.0
        %422 = vmatprep.subr.mxu0 0.0
        %423 = vmatpush1.msra.mxu0 0.0
        %424 = vmatprep.subr.mxu0 0.0
        %425 = vmatpush1.msra.mxu0 0.0
        %426 = vmatprep.subr.mxu0 0.0
        %427 = vmatpush1.msra.mxu0 0.0
        %428 = vmatprep.mubr.f32.mxu0 0.0
        %429 = vmatmul.mubr.f32.gmra.mrb[0].mxu0 %v346
        %v430 = vpop.f32.mrb[0].mxu0
        %v431 = vadd.f32 0.0, %v430
        %v432 = vpop.f32.mrb[0].mxu0
        %433 = vdwg.mxu0
        %v434 = vadd.f32 %v347, %v431
        %435 = vst [vmem:[#allocation2] sm:$0xff] %v434
        %v436 = vld [vmem:[#allocation3] sm:$0xff]
        %v437 = vld [vmem:[#allocation6] sm:$0xff]
        %v438 = vld [vmem:[#allocation6 + $0x8] sm:$0xff]
        %v439 = vld [vmem:[#allocation6 + $0x10] sm:$0xff]
        %v440 = vld [vmem:[#allocation6 + $0x18] sm:$0xff]
        %v441 = vld [vmem:[#allocation6 + $0x20] sm:$0xff]
        %v442 = vld [vmem:[#allocation6 + $0x28] sm:$0xff]
        %v443 = vld [vmem:[#allocation6 + $0x30] sm:$0xff]
        %v444 = vld [vmem:[#allocation6 + $0x38] sm:$0xff]
        %v445 = vld [vmem:[#allocation6 + $0x40] sm:$0xff]
        %v446 = vld [vmem:[#allocation6 + $0x48] sm:$0xff]
        %v447 = vld [vmem:[#allocation6 + $0x50] sm:$0xff]
        %v448 = vld [vmem:[#allocation6 + $0x58] sm:$0xff]
        %v449 = vld [vmem:[#allocation6 + $0x60] sm:$0xff]
        %v450 = vld [vmem:[#allocation6 + $0x68] sm:$0xff]
        %v451 = vld [vmem:[#allocation6 + $0x70] sm:$0xff]
        %v452 = vld [vmem:[#allocation6 + $0x78] sm:$0xff]
        %453 = vmatprep.subr.mxu0 0.0
        %454 = vmatpush1.msra.mxu0 %v437
        %455 = vmatprep.subr.mxu0 0.0
        %456 = vmatpush1.msra.mxu0 %v438
        %457 = vmatprep.subr.mxu0 0.0
        %458 = vmatpush1.msra.mxu0 %v439
        %459 = vmatprep.subr.mxu0 0.0
        %460 = vmatpush1.msra.mxu0 %v440
        %461 = vmatprep.subr.mxu0 0.0
        %462 = vmatpush1.msra.mxu0 %v441
        %463 = vmatprep.subr.mxu0 0.0
        %464 = vmatpush1.msra.mxu0 %v442
        %465 = vmatprep.subr.mxu0 0.0
        %466 = vmatpush1.msra.mxu0 %v443
        %467 = vmatprep.subr.mxu0 0.0
        %468 = vmatpush1.msra.mxu0 %v444
        %469 = vmatprep.subr.mxu0 0.0
        %470 = vmatpush1.msra.mxu0 %v445
        %471 = vmatprep.subr.mxu0 0.0
        %472 = vmatpush1.msra.mxu0 %v446
        %473 = vmatprep.subr.mxu0 0.0
        %474 = vmatpush1.msra.mxu0 %v447
        %475 = vmatprep.subr.mxu0 0.0
        %476 = vmatpush1.msra.mxu0 %v448
        %477 = vmatprep.subr.mxu0 0.0
        %478 = vmatpush1.msra.mxu0 %v449
        %479 = vmatprep.subr.mxu0 0.0
        %480 = vmatpush1.msra.mxu0 %v450
        %481 = vmatprep.subr.mxu0 0.0
        %482 = vmatpush1.msra.mxu0 %v451
        %483 = vmatprep.subr.mxu0 0.0
        %484 = vmatpush1.msra.mxu0 %v452
        %485 = vmatprep.subr.mxu0 0.0
        %486 = vmatpush1.msra.mxu0 0.0
        %487 = vmatprep.subr.mxu0 0.0
        %488 = vmatpush1.msra.mxu0 0.0
        %489 = vmatprep.subr.mxu0 0.0
        %490 = vmatpush1.msra.mxu0 0.0
        %491 = vmatprep.subr.mxu0 0.0
        %492 = vmatpush1.msra.mxu0 0.0
        %493 = vmatprep.subr.mxu0 0.0
        %494 = vmatpush1.msra.mxu0 0.0
        %495 = vmatprep.subr.mxu0 0.0
        %496 = vmatpush1.msra.mxu0 0.0
        %497 = vmatprep.subr.mxu0 0.0
        %498 = vmatpush1.msra.mxu0 0.0
        %499 = vmatprep.subr.mxu0 0.0
        %500 = vmatpush1.msra.mxu0 0.0
        %501 = vmatprep.subr.mxu0 0.0
        %502 = vmatpush1.msra.mxu0 0.0
        %503 = vmatprep.subr.mxu0 0.0
        %504 = vmatpush1.msra.mxu0 0.0
        %505 = vmatprep.subr.mxu0 0.0
        %506 = vmatpush1.msra.mxu0 0.0
        %507 = vmatprep.subr.mxu0 0.0
        %508 = vmatpush1.msra.mxu0 0.0
        %509 = vmatprep.subr.mxu0 0.0
        %510 = vmatpush1.msra.mxu0 0.0
        %511 = vmatprep.subr.mxu0 0.0
        %512 = vmatpush1.msra.mxu0 0.0
        %513 = vmatprep.subr.mxu0 0.0
        %514 = vmatpush1.msra.mxu0 0.0
        %515 = vmatprep.subr.mxu0 0.0
        %516 = vmatpush1.msra.mxu0 0.0
        %517 = vmatprep.mubr.f32.mxu0 0.0
        %518 = vmatmul.mubr.f32.gmra.mrb[0].mxu0 %v346
        %v519 = vpop.f32.mrb[0].mxu0
        %v520 = vadd.f32 0.0, %v519
        %v521 = vpop.f32.mrb[0].mxu0
        %522 = vdwg.mxu0
        %v523 = vadd.f32 %v436, %v520
        %524 = vst [vmem:[#allocation3] sm:$0xff] %v523
        // Predicated region
        $region53: #{mingru_forward.1} parent=39 // pred_check
          %p525 = pneg %p340
        $region54: #{mingru_forward.1} parent=39 // pred_check_branch
          %527 = sbr.rel (%p525) target = $region56
        $region55: #{mingru_forward.1} parent=39 // pred_region
          %v528 = vld [vmem:[#allocation2] sm:$0xff]
          %v529 = vld [vmem:[%s329] sm:$0x1]
          %v531 = vlaneseq
          %v532 = vshrl.u32 %v531, 7
          %v533 = vsub.s32 0, %v532
          %v534 = vrot.slane %v529, %v533
          %v536 = vadd.f32 %v528, %v534
          %v537 = vld [vmem:[#allocation3] sm:$0xff]
          %v538 = vld [vmem:[%s332] sm:$0x1]
          %v540 = vlaneseq
          %v541 = vshrl.u32 %v540, 7
          %v542 = vsub.s32 0, %v541
          %v543 = vrot.slane %v538, %v542
          %v545 = vadd.f32 %v537, %v543
          %v546 = vxor.u32 %v545, 2147483648
          %v547 = vmul.f32 %v546, 1.442695
          %v548 = vpow.pop %v547
          %v549 = vadd.f32 %v548, 1.0
          %v550 = vrcp.pop %v549
          %v551 = vmul.f32 1.0, %v550
          %v552 = vmul.f32 %v551, %v536
          %553 = vst [vmem:[%s339] sm:$0xff] %v552
        $region56: #{mingru_forward.1} parent=39 // pred_fallthru
          _
        %p554 = scmp.lt.s32.totalorder %s23, 1
        %s555 = scalar_select %p554, %s23, 1
        %p556 = scmp.lt.s32.totalorder %s24, 0
        %s557 = scalar_select %p556, %s24, 0
        %s558 = sadd.s32 %s557, %s555
        %s559 = smul.addr %s558, 8
        %s560 = scalar_lea.vmem %s5, %s559
        // Predicated region
        $region57: #{mingru_forward.1} parent=39 // pred_check
          %p561 = pneg %p193
        $region58: #{mingru_forward.1} parent=39 // pred_check_branch
          %563 = sbr.rel (%p561) target = $region60
        $region59: #{mingru_forward.1} parent=39 // pred_region
          _
        $region60: #{mingru_forward.1} parent=39 // pred_fallthru
          _
      $region40: #{mingru_forward.1} parent=5 // pred_fallthru
        _
      %p564 = scmp.le.s32.totalorder 2, %s13
      // Predicated region
      $region61: #{mingru_forward.1} parent=5 // pred_check
        %p565 = pneg %p564
      $region62: #{mingru_forward.1} parent=5 // pred_check_branch
        %567 = sbr.rel (%p565) target = $region64
      $region63: #{mingru_forward.1} parent=5 // pred_region
        %s568 = ssub.s32 %s13, 2
        // Predicated region
        $region65: #{mingru_forward.1} parent=63 // pred_check
          %p569 = pneg %p199
        $region66: #{mingru_forward.1} parent=63 // pred_check_branch
          %571 = sbr.rel (%p569) target = $region68
        $region67: #{mingru_forward.1} parent=63 // pred_region
          %p572 = scmp.lt.s32.totalorder %s26, 1
          %s573 = scalar_select %p572, %s26, 1
          %p574 = scmp.lt.s32.totalorder %s27, 0
          %s575 = scalar_select %p574, %s27, 0
          %s576 = sadd.s32 %s575, %s573
          %s577 = smul.addr %s576, 8
          %s578 = scalar_lea.vmem %s5, %s577
        $region68: #{mingru_forward.1} parent=63 // pred_fallthru
          _
      $region64: #{mingru_forward.1} parent=5 // pred_fallthru
        _
    $region6: #{mingru_forward.1} parent=1 // loop_footer
      %s17 = sadd.s32 1, %s13
    $region7: #{mingru_forward.1} parent=1 // loop_footer_branch
      %12 = sbr.rel target = $region3
    $region8: #{mingru_forward.1} parent=1 // loop_exit
      _
    %579 = vsyncpa [#allocation5], 1
    %s580 = scalar_lea.sflag [#allocation5], 1
    %581 = vsyncpa %s580, 1
    %582 = vsyncpa [#allocation7], 1

</llo_original>
